<compile_context>
chip_gen: v7x
topology: tpu7x:2x2x1
jax: 0.10.0
libtpu: 0.0.40
codegen_flags: <defaults>
</compile_context>

<pallas_src>
import jax
import jax.numpy as jnp
from jax.experimental import pallas as pl
from jax.experimental.pallas import tpu as pltpu


def _sigmoid_mul_kernel(x_ref, s_ref, o_ref):
    # x_ref: (tile_r, HW)  activation tile (native dtype)
    # s_ref: (tile_r, 1)   per-channel gate logits (original dtype)
    # o_ref: (tile_r, HW)  output tile
    # Sigmoid of the tiny gate column in f32 on the EUP (free slot), then a
    # broadcasted multiply in the activation's native dtype.
    gate = jax.nn.sigmoid(s_ref[...].astype(jnp.float32)).astype(x_ref.dtype)
    o_ref[...] = x_ref[...] * gate


def _cdiv(a: int, b: int) -> int:
    return -(-a // b)


def _round_up(a: int, b: int) -> int:
    return _cdiv(a, b) * b


def _sublane_pack(dtype) -> int:
    # Sublane alignment requirement for the second-to-last block dim.
    itemsize = jnp.dtype(dtype).itemsize
    return 8 * max(1, 4 // itemsize)  # f32 -> 8, bf16 -> 16, int8 -> 32


def _tpu_hw_info():
    """(physical_vmem_bytes, tensorcores_per_device) with safe fallbacks."""
    kind = ""
    try:
        kind = (jax.devices()[0].device_kind or "").lower()
    except Exception:
        pass
    # v7x (and v4 megacore) expose 2 TensorCores per device; others 1.
    num_tcs = 2 if ("v7" in kind or "v4" in kind) else 1
    vmem_bytes = (64 << 20) if "v7" in kind else (128 << 20)
    try:
        info = pltpu.get_tpu_info()
        vmem_bytes = int(getattr(info, "vmem_capacity_bytes", vmem_bytes))
    except Exception:
        pass
    return vmem_bytes, num_tcs


def _pick_tile_rows(rows: int, hw: int, itemsize: int, pack: int,
                    budget_bytes: int, min_steps: int) -> int:
    """Pack-aligned row tile: fits the VMEM budget, gives >= min_steps grid steps."""
    rows_padded = _round_up(rows, pack)
    by_budget = max(pack, (budget_bytes // max(1, hw * itemsize)) // pack * pack)
    tile = min(by_budget, rows_padded)
    if min_steps > 1:
        by_steps = max(pack, _round_up(_cdiv(rows, min_steps), pack))
        tile = min(tile, by_steps)
    return tile


def sigmoid_mul(x108, x112):
    """x108: [N, C, H, W], x112: [N, C, 1, 1] -> [N, C, H, W]."""
    N, C, H, W = x108.shape
    assert x112.shape == (N, C, 1, 1)
    hw = H * W
    rows = N * C

    x2d = x108.reshape(rows, hw)
    # Keep the gate logits in their ORIGINAL dtype (no wrapper-side cast);
    # the f32 sigmoid + cast happens inside the kernel.
    s2d = x112.reshape(rows, 1)

    act_item = jnp.dtype(x108.dtype).itemsize
    gate_item = jnp.dtype(x112.dtype).itemsize
    pack = _sublane_pack(x108.dtype)

    vmem_bytes, num_tcs = _tpu_hw_info()
    # ~2 MiB per block -> double-buffered in+out blocks stay well under the
    # scoped-VMEM default on every generation (v5e: 16 MiB, v7x: 32 MiB).
    budget_bytes = 2 << 20
    tile_r = _pick_tile_rows(rows, hw, act_item, pack, budget_bytes, num_tcs)
    grid = (_cdiv(rows, tile_r),)

    # Explicit scoped-VMEM limit sized from the actual blocks (double-buffered
    # in + gate + out, plus slack), capped far below v7x's 64 MiB physical.
    block_bytes = 2 * tile_r * hw * act_item + tile_r * gate_item
    vmem_limit = int(min(max(4 * block_bytes + (2 << 20), 16 << 20),
                         48 << 20, vmem_bytes // 2))

    cost = pl.CostEstimate(
        flops=rows * hw,            # one multiply per element
        transcendentals=rows,       # one sigmoid per channel
        bytes_accessed=2 * rows * hw * act_item + rows * gate_item,
    )

    out2d = pl.pallas_call(
        _sigmoid_mul_kernel,
        out_shape=jax.ShapeDtypeStruct((rows, hw), x108.dtype),
        grid=grid,
        in_specs=[
            pl.BlockSpec((tile_r, hw), lambda i: (i, 0)),
            pl.BlockSpec((tile_r, 1), lambda i: (i, 0)),
        ],
        out_specs=pl.BlockSpec((tile_r, hw), lambda i: (i, 0)),
        compiler_params=pltpu.CompilerParams(
            dimension_semantics=("parallel",),
            vmem_limit_bytes=vmem_limit,
        ),
        cost_estimate=cost,
    )(x2d, s2d)

    return out2d.reshape(N, C, H, W)


if __name__ == "__main__":
    key = jax.random.PRNGKey(0)
    k1, k2 = jax.random.split(key)

    # Shapes consistent with the module's forward (EfficientNet-B0 SE gate):
    # activation [1, 480, 14, 14], gate logits [1, 480, 1, 1].
    x108 = jax.random.normal(k1, (1, 480, 14, 14), dtype=jnp.float32)
    x112 = jax.random.normal(k2, (1, 480, 1, 1), dtype=jnp.float32)

    out = sigmoid_mul(x108, x112)
    out = jax.block_until_ready(out)

    # Reference check in plain JAX
    ref = x108 * jax.nn.sigmoid(x112)
    assert out.shape == (1, 480, 14, 14)
    assert jnp.allclose(out, ref, atol=1e-6, rtol=1e-6)

    print("KERNEL_OK")
</pallas_src>

<mosaic_0001>
module attributes {stable_mosaic.version = 11 : i64} {
  func.func @_sigmoid_mul_kernel(%arg0: i32, %arg1: memref<480x196xf32, #tpu.memory_space<vmem>>, %arg2: memref<480x1xf32, #tpu.memory_space<vmem>>, %arg3: memref<480x196xf32, #tpu.memory_space<vmem>>) attributes {dimension_semantics = [#tpu.dimension_semantics<parallel>], iteration_bounds = array<i64: 1>, scalar_prefetch = 0 : i64, scratch_operands = 0 : i64, tpu.core_type = #tpu.core_type<tc>, window_params = [{transform_indices = @transform_0, window_bounds = array<i64: 480, 196>}, {transform_indices = @transform_1, window_bounds = array<i64: 480, 1>}, {transform_indices = @transform_2, window_bounds = array<i64: 480, 196>}]} {
    %c0 = arith.constant 0 : index
    %c0_0 = arith.constant 0 : index
    %0 = vector.load %arg2[%c0, %c0_0] : memref<480x1xf32, #tpu.memory_space<vmem>>, vector<480x1xf32>
    %1 = arith.negf %0 : vector<480x1xf32>
    %2 = math.exp %1 : vector<480x1xf32>
    %cst = arith.constant 1.000000e+00 : f32
    %3 = vector.broadcast %cst : f32 to vector<480x1xf32>
    %4 = arith.addf %3, %2 : vector<480x1xf32>
    %5 = arith.divf %3, %4 : vector<480x1xf32>
    %c0_1 = arith.constant 0 : index
    %c0_2 = arith.constant 0 : index
    %6 = vector.load %arg1[%c0_1, %c0_2] : memref<480x196xf32, #tpu.memory_space<vmem>>, vector<480x196xf32>
    %7 = vector.broadcast %5 : vector<480x1xf32> to vector<480x196xf32>
    %8 = arith.mulf %6, %7 : vector<480x196xf32>
    %c0_3 = arith.constant 0 : index
    %c0_4 = arith.constant 0 : index
    %9 = vector.load %arg3[%c0_3, %c0_4] : memref<480x196xf32, #tpu.memory_space<vmem>>, vector<480x196xf32>
    tpu.vector_store %arg3[%c0_3, %c0_4], %8 {strides = array<i32>} : memref<480x196xf32, #tpu.memory_space<vmem>>, vector<480x196xf32>,
    return
  }
  func.func @transform_0(%arg0: i32) -> (i32, i32) {
    %c0_i32 = arith.constant 0 : i32
    %c0_i32_0 = arith.constant 0 : i32
    return %arg0, %c0_i32 : i32, i32
  }
  func.func @transform_1(%arg0: i32) -> (i32, i32) {
    %c0_i32 = arith.constant 0 : i32
    %c0_i32_0 = arith.constant 0 : i32
    return %arg0, %c0_i32 : i32, i32
  }
  func.func @transform_2(%arg0: i32) -> (i32, i32) {
    %c0_i32 = arith.constant 0 : i32
    %c0_i32_0 = arith.constant 0 : i32
    return %arg0, %c0_i32 : i32, i32
  }
}

</mosaic_0001>

<llo_original>
// kernel: tpu_custom_call.1
$region0: #{tpu_custom_call.1}
  #allocation0 [shape = 'u32[]', space=smem, size = 0x4, offset = 0x4, fixed_abs, tag = 'smem constant byte address 0x4 - core index']
  #allocation1 [shape = 'u32[144,128]{1,0:T(1,128)}', space=vmem, size = 0x12000, scoped, tag = 'internal scratch']
  %s0 = inlined_call_operand.vmem [shape: f32[480,196], index: 0, kind: input, shape index: {}]
  %s1 = inlined_call_operand.vmem [shape: f32[480,1], index: 1, kind: input, shape index: {}]
  %s2 = inlined_call_operand.vmem [shape: f32[480,196], index: 2, kind: output, shape index: {}]
  %s3 = sld [smem:[#allocation0]]
  $region18: #{tpu_custom_call.1} parent=0
    _
  %s5 = ssub.s32 1, %s3
  %s6 = scalar_select 0, %s5, %s3
  // Predicated region
  $region2: #{tpu_custom_call.1} parent=0 // pred_check
    _
  $region3: #{tpu_custom_call.1} parent=0 // pred_check_branch
    %8 = sbr.rel (0) target = $region5
  $region4: #{tpu_custom_call.1} parent=0 // pred_region
    _
  $region5: #{tpu_custom_call.1} parent=0 // pred_fallthru
    _
  // Predicated region
  $region6: #{tpu_custom_call.1} parent=0 // pred_check
    _
  $region7: #{tpu_custom_call.1} parent=0 // pred_check_branch
    %10 = sbr.rel (0) target = $region9
  $region8: #{tpu_custom_call.1} parent=0 // pred_region
    _
  $region9: #{tpu_custom_call.1} parent=0 // pred_fallthru
    _
  %v11 = vld [vmem:[%s1] sm:$0xff]
  %v12 = vld [vmem:[%s1 + $0x8] sm:$0xff]
  %v13 = vld [vmem:[%s1 + $0x10] sm:$0xff]
  %v14 = vld [vmem:[%s1 + $0x18] sm:$0xff]
  %v15 = vld [vmem:[%s1 + $0x20] sm:$0xff]
  %v16 = vld [vmem:[%s1 + $0x28] sm:$0xff]
  %v17 = vld [vmem:[%s1 + $0x30] sm:$0xff]
  %v18 = vld [vmem:[%s1 + $0x38] sm:$0xff]
  %v19 = vld [vmem:[%s1 + $0x40] sm:$0xff]
  %v20 = vld [vmem:[%s1 + $0x48] sm:$0xff]
  %v21 = vld [vmem:[%s1 + $0x50] sm:$0xff]
  %v22 = vld [vmem:[%s1 + $0x58] sm:$0xff]
  %v23 = vld [vmem:[%s1 + $0x60] sm:$0xff]
  %v24 = vld [vmem:[%s1 + $0x68] sm:$0xff]
  %v25 = vld [vmem:[%s1 + $0x70] sm:$0xff]
  %v26 = vld [vmem:[%s1 + $0x78] sm:$0xff]
  %v27 = vld [vmem:[%s1 + $0x80] sm:$0xff]
  %v28 = vld [vmem:[%s1 + $0x88] sm:$0xff]
  %v29 = vld [vmem:[%s1 + $0x90] sm:$0xff]
  %v30 = vld [vmem:[%s1 + $0x98] sm:$0xff]
  %v31 = vld [vmem:[%s1 + $0xa0] sm:$0xff]
  %v32 = vld [vmem:[%s1 + $0xa8] sm:$0xff]
  %v33 = vld [vmem:[%s1 + $0xb0] sm:$0xff]
  %v34 = vld [vmem:[%s1 + $0xb8] sm:$0xff]
  %v35 = vld [vmem:[%s1 + $0xc0] sm:$0xff]
  %v36 = vld [vmem:[%s1 + $0xc8] sm:$0xff]
  %v37 = vld [vmem:[%s1 + $0xd0] sm:$0xff]
  %v38 = vld [vmem:[%s1 + $0xd8] sm:$0xff]
  %v39 = vld [vmem:[%s1 + $0xe0] sm:$0xff]
  %v40 = vld [vmem:[%s1 + $0xe8] sm:$0xff]
  %v41 = vld [vmem:[%s1 + $0xf0] sm:$0xff]
  %v42 = vld [vmem:[%s1 + $0xf8] sm:$0xff]
  %v43 = vld [vmem:[%s1 + $0x100] sm:$0xff]
  %v44 = vld [vmem:[%s1 + $0x108] sm:$0xff]
  %v45 = vld [vmem:[%s1 + $0x110] sm:$0xff]
  %v46 = vld [vmem:[%s1 + $0x118] sm:$0xff]
  %v47 = vld [vmem:[%s1 + $0x120] sm:$0xff]
  %v48 = vld [vmem:[%s1 + $0x128] sm:$0xff]
  %v49 = vld [vmem:[%s1 + $0x130] sm:$0xff]
  %v50 = vld [vmem:[%s1 + $0x138] sm:$0xff]
  %v51 = vld [vmem:[%s1 + $0x140] sm:$0xff]
  %v52 = vld [vmem:[%s1 + $0x148] sm:$0xff]
  %v53 = vld [vmem:[%s1 + $0x150] sm:$0xff]
  %v54 = vld [vmem:[%s1 + $0x158] sm:$0xff]
  %v55 = vld [vmem:[%s1 + $0x160] sm:$0xff]
  %v56 = vld [vmem:[%s1 + $0x168] sm:$0xff]
  %v57 = vld [vmem:[%s1 + $0x170] sm:$0xff]
  %v58 = vld [vmem:[%s1 + $0x178] sm:$0xff]
  %v59 = vld [vmem:[%s1 + $0x180] sm:$0xff]
  %v60 = vld [vmem:[%s1 + $0x188] sm:$0xff]
  %v61 = vld [vmem:[%s1 + $0x190] sm:$0xff]
  %v62 = vld [vmem:[%s1 + $0x198] sm:$0xff]
  %v63 = vld [vmem:[%s1 + $0x1a0] sm:$0xff]
  %v64 = vld [vmem:[%s1 + $0x1a8] sm:$0xff]
  %v65 = vld [vmem:[%s1 + $0x1b0] sm:$0xff]
  %v66 = vld [vmem:[%s1 + $0x1b8] sm:$0xff]
  %v67 = vld [vmem:[%s1 + $0x1c0] sm:$0xff]
  %v68 = vld [vmem:[%s1 + $0x1c8] sm:$0xff]
  %v69 = vld [vmem:[%s1 + $0x1d0] sm:$0xff]
  %v70 = vld [vmem:[%s1 + $0x1d8] sm:$0xff]
  %v71 = vxor.u32 %v11, 2147483648
  %v72 = vxor.u32 %v12, 2147483648
  %v73 = vxor.u32 %v13, 2147483648
  %v74 = vxor.u32 %v14, 2147483648
  %v75 = vxor.u32 %v15, 2147483648
  %v76 = vxor.u32 %v16, 2147483648
  %v77 = vxor.u32 %v17, 2147483648
  %v78 = vxor.u32 %v18, 2147483648
  %v79 = vxor.u32 %v19, 2147483648
  %v80 = vxor.u32 %v20, 2147483648
  %v81 = vxor.u32 %v21, 2147483648
  %v82 = vxor.u32 %v22, 2147483648
  %v83 = vxor.u32 %v23, 2147483648
  %v84 = vxor.u32 %v24, 2147483648
  %v85 = vxor.u32 %v25, 2147483648
  %v86 = vxor.u32 %v26, 2147483648
  %v87 = vxor.u32 %v27, 2147483648
  %v88 = vxor.u32 %v28, 2147483648
  %v89 = vxor.u32 %v29, 2147483648
  %v90 = vxor.u32 %v30, 2147483648
  %v91 = vxor.u32 %v31, 2147483648
  %v92 = vxor.u32 %v32, 2147483648
  %v93 = vxor.u32 %v33, 2147483648
  %v94 = vxor.u32 %v34, 2147483648
  %v95 = vxor.u32 %v35, 2147483648
  %v96 = vxor.u32 %v36, 2147483648
  %v97 = vxor.u32 %v37, 2147483648
  %v98 = vxor.u32 %v38, 2147483648
  %v99 = vxor.u32 %v39, 2147483648
  %v100 = vxor.u32 %v40, 2147483648
  %v101 = vxor.u32 %v41, 2147483648
  %v102 = vxor.u32 %v42, 2147483648
  %v103 = vxor.u32 %v43, 2147483648
  %v104 = vxor.u32 %v44, 2147483648
  %v105 = vxor.u32 %v45, 2147483648
  %v106 = vxor.u32 %v46, 2147483648
  %v107 = vxor.u32 %v47, 2147483648
  %v108 = vxor.u32 %v48, 2147483648
  %v109 = vxor.u32 %v49, 2147483648
  %v110 = vxor.u32 %v50, 2147483648
  %v111 = vxor.u32 %v51, 2147483648
  %v112 = vxor.u32 %v52, 2147483648
  %v113 = vxor.u32 %v53, 2147483648
  %v114 = vxor.u32 %v54, 2147483648
  %v115 = vxor.u32 %v55, 2147483648
  %v116 = vxor.u32 %v56, 2147483648
  %v117 = vxor.u32 %v57, 2147483648
  %v118 = vxor.u32 %v58, 2147483648
  %v119 = vxor.u32 %v59, 2147483648
  %v120 = vxor.u32 %v60, 2147483648
  %v121 = vxor.u32 %v61, 2147483648
  %v122 = vxor.u32 %v62, 2147483648
  %v123 = vxor.u32 %v63, 2147483648
  %v124 = vxor.u32 %v64, 2147483648
  %v125 = vxor.u32 %v65, 2147483648
  %v126 = vxor.u32 %v66, 2147483648
  %v127 = vxor.u32 %v67, 2147483648
  %v128 = vxor.u32 %v68, 2147483648
  %v129 = vxor.u32 %v69, 2147483648
  %v130 = vxor.u32 %v70, 2147483648
  %v131 = vmul.f32 %v71, 1.442695
  %v132 = vpow.pop %v131
  %v133 = vmul.f32 %v72, 1.442695
  %v134 = vpow.pop %v133
  %v135 = vmul.f32 %v73, 1.442695
  %v136 = vpow.pop %v135
  %v137 = vmul.f32 %v74, 1.442695
  %v138 = vpow.pop %v137
  %v139 = vmul.f32 %v75, 1.442695
  %v140 = vpow.pop %v139
  %v141 = vmul.f32 %v76, 1.442695
  %v142 = vpow.pop %v141
  %v143 = vmul.f32 %v77, 1.442695
  %v144 = vpow.pop %v143
  %v145 = vmul.f32 %v78, 1.442695
  %v146 = vpow.pop %v145
  %v147 = vmul.f32 %v79, 1.442695
  %v148 = vpow.pop %v147
  %v149 = vmul.f32 %v80, 1.442695
  %v150 = vpow.pop %v149
  %v151 = vmul.f32 %v81, 1.442695
  %v152 = vpow.pop %v151
  %v153 = vmul.f32 %v82, 1.442695
  %v154 = vpow.pop %v153
  %v155 = vmul.f32 %v83, 1.442695
  %v156 = vpow.pop %v155
  %v157 = vmul.f32 %v84, 1.442695
  %v158 = vpow.pop %v157
  %v159 = vmul.f32 %v85, 1.442695
  %v160 = vpow.pop %v159
  %v161 = vmul.f32 %v86, 1.442695
  %v162 = vpow.pop %v161
  %v163 = vmul.f32 %v87, 1.442695
  %v164 = vpow.pop %v163
  %v165 = vmul.f32 %v88, 1.442695
  %v166 = vpow.pop %v165
  %v167 = vmul.f32 %v89, 1.442695
  %v168 = vpow.pop %v167
  %v169 = vmul.f32 %v90, 1.442695
  %v170 = vpow.pop %v169
  %v171 = vmul.f32 %v91, 1.442695
  %v172 = vpow.pop %v171
  %v173 = vmul.f32 %v92, 1.442695
  %v174 = vpow.pop %v173
  %v175 = vmul.f32 %v93, 1.442695
  %v176 = vpow.pop %v175
  %v177 = vmul.f32 %v94, 1.442695
  %v178 = vpow.pop %v177
  %v179 = vmul.f32 %v95, 1.442695
  %v180 = vpow.pop %v179
  %v181 = vmul.f32 %v96, 1.442695
  %v182 = vpow.pop %v181
  %v183 = vmul.f32 %v97, 1.442695
  %v184 = vpow.pop %v183
  %v185 = vmul.f32 %v98, 1.442695
  %v186 = vpow.pop %v185
  %v187 = vmul.f32 %v99, 1.442695
  %v188 = vpow.pop %v187
  %v189 = vmul.f32 %v100, 1.442695
  %v190 = vpow.pop %v189
  %v191 = vmul.f32 %v101, 1.442695
  %v192 = vpow.pop %v191
  %v193 = vmul.f32 %v102, 1.442695
  %v194 = vpow.pop %v193
  %v195 = vmul.f32 %v103, 1.442695
  %v196 = vpow.pop %v195
  %v197 = vmul.f32 %v104, 1.442695
  %v198 = vpow.pop %v197
  %v199 = vmul.f32 %v105, 1.442695
  %v200 = vpow.pop %v199
  %v201 = vmul.f32 %v106, 1.442695
  %v202 = vpow.pop %v201
  %v203 = vmul.f32 %v107, 1.442695
  %v204 = vpow.pop %v203
  %v205 = vmul.f32 %v108, 1.442695
  %v206 = vpow.pop %v205
  %v207 = vmul.f32 %v109, 1.442695
  %v208 = vpow.pop %v207
  %v209 = vmul.f32 %v110, 1.442695
  %v210 = vpow.pop %v209
  %v211 = vmul.f32 %v111, 1.442695
  %v212 = vpow.pop %v211
  %v213 = vmul.f32 %v112, 1.442695
  %v214 = vpow.pop %v213
  %v215 = vmul.f32 %v113, 1.442695
  %v216 = vpow.pop %v215
  %v217 = vmul.f32 %v114, 1.442695
  %v218 = vpow.pop %v217
  %v219 = vmul.f32 %v115, 1.442695
  %v220 = vpow.pop %v219
  %v221 = vmul.f32 %v116, 1.442695
  %v222 = vpow.pop %v221
  %v223 = vmul.f32 %v117, 1.442695
  %v224 = vpow.pop %v223
  %v225 = vmul.f32 %v118, 1.442695
  %v226 = vpow.pop %v225
  %v227 = vmul.f32 %v119, 1.442695
  %v228 = vpow.pop %v227
  %v229 = vmul.f32 %v120, 1.442695
  %v230 = vpow.pop %v229
  %v231 = vmul.f32 %v121, 1.442695
  %v232 = vpow.pop %v231
  %v233 = vmul.f32 %v122, 1.442695
  %v234 = vpow.pop %v233
  %v235 = vmul.f32 %v123, 1.442695
  %v236 = vpow.pop %v235
  %v237 = vmul.f32 %v124, 1.442695
  %v238 = vpow.pop %v237
  %v239 = vmul.f32 %v125, 1.442695
  %v240 = vpow.pop %v239
  %v241 = vmul.f32 %v126, 1.442695
  %v242 = vpow.pop %v241
  %v243 = vmul.f32 %v127, 1.442695
  %v244 = vpow.pop %v243
  %v245 = vmul.f32 %v128, 1.442695
  %v246 = vpow.pop %v245
  %v247 = vmul.f32 %v129, 1.442695
  %v248 = vpow.pop %v247
  %v249 = vmul.f32 %v130, 1.442695
  %v250 = vpow.pop %v249
  %v251 = vadd.f32 %v132, 1.0
  %v252 = vadd.f32 %v134, 1.0
  %v253 = vadd.f32 %v136, 1.0
  %v254 = vadd.f32 %v138, 1.0
  %v255 = vadd.f32 %v140, 1.0
  %v256 = vadd.f32 %v142, 1.0
  %v257 = vadd.f32 %v144, 1.0
  %v258 = vadd.f32 %v146, 1.0
  %v259 = vadd.f32 %v148, 1.0
  %v260 = vadd.f32 %v150, 1.0
  %v261 = vadd.f32 %v152, 1.0
  %v262 = vadd.f32 %v154, 1.0
  %v263 = vadd.f32 %v156, 1.0
  %v264 = vadd.f32 %v158, 1.0
  %v265 = vadd.f32 %v160, 1.0
  %v266 = vadd.f32 %v162, 1.0
  %v267 = vadd.f32 %v164, 1.0
  %v268 = vadd.f32 %v166, 1.0
  %v269 = vadd.f32 %v168, 1.0
  %v270 = vadd.f32 %v170, 1.0
  %v271 = vadd.f32 %v172, 1.0
  %v272 = vadd.f32 %v174, 1.0
  %v273 = vadd.f32 %v176, 1.0
  %v274 = vadd.f32 %v178, 1.0
  %v275 = vadd.f32 %v180, 1.0
  %v276 = vadd.f32 %v182, 1.0
  %v277 = vadd.f32 %v184, 1.0
  %v278 = vadd.f32 %v186, 1.0
  %v279 = vadd.f32 %v188, 1.0
  %v280 = vadd.f32 %v190, 1.0
  %v281 = vadd.f32 %v192, 1.0
  %v282 = vadd.f32 %v194, 1.0
  %v283 = vadd.f32 %v196, 1.0
  %v284 = vadd.f32 %v198, 1.0
  %v285 = vadd.f32 %v200, 1.0
  %v286 = vadd.f32 %v202, 1.0
  %v287 = vadd.f32 %v204, 1.0
  %v288 = vadd.f32 %v206, 1.0
  %v289 = vadd.f32 %v208, 1.0
  %v290 = vadd.f32 %v210, 1.0
  %v291 = vadd.f32 %v212, 1.0
  %v292 = vadd.f32 %v214, 1.0
  %v293 = vadd.f32 %v216, 1.0
  %v294 = vadd.f32 %v218, 1.0
  %v295 = vadd.f32 %v220, 1.0
  %v296 = vadd.f32 %v222, 1.0
  %v297 = vadd.f32 %v224, 1.0
  %v298 = vadd.f32 %v226, 1.0
  %v299 = vadd.f32 %v228, 1.0
  %v300 = vadd.f32 %v230, 1.0
  %v301 = vadd.f32 %v232, 1.0
  %v302 = vadd.f32 %v234, 1.0
  %v303 = vadd.f32 %v236, 1.0
  %v304 = vadd.f32 %v238, 1.0
  %v305 = vadd.f32 %v240, 1.0
  %v306 = vadd.f32 %v242, 1.0
  %v307 = vadd.f32 %v244, 1.0
  %v308 = vadd.f32 %v246, 1.0
  %v309 = vadd.f32 %v248, 1.0
  %v310 = vadd.f32 %v250, 1.0
  %v311 = vrcp.pop %v251
  %v312 = vmul.f32 1.0, %v311
  %v313 = vrcp.pop %v252
  %v314 = vmul.f32 1.0, %v313
  %v315 = vrcp.pop %v253
  %v316 = vmul.f32 1.0, %v315
  %v317 = vrcp.pop %v254
  %v318 = vmul.f32 1.0, %v317
  %v319 = vrcp.pop %v255
  %v320 = vmul.f32 1.0, %v319
  %v321 = vrcp.pop %v256
  %v322 = vmul.f32 1.0, %v321
  %v323 = vrcp.pop %v257
  %v324 = vmul.f32 1.0, %v323
  %v325 = vrcp.pop %v258
  %v326 = vmul.f32 1.0, %v325
  %v327 = vrcp.pop %v259
  %v328 = vmul.f32 1.0, %v327
  %v329 = vrcp.pop %v260
  %v330 = vmul.f32 1.0, %v329
  %v331 = vrcp.pop %v261
  %v332 = vmul.f32 1.0, %v331
  %v333 = vrcp.pop %v262
  %v334 = vmul.f32 1.0, %v333
  %v335 = vrcp.pop %v263
  %v336 = vmul.f32 1.0, %v335
  %v337 = vrcp.pop %v264
  %v338 = vmul.f32 1.0, %v337
  %v339 = vrcp.pop %v265
  %v340 = vmul.f32 1.0, %v339
  %v341 = vrcp.pop %v266
  %v342 = vmul.f32 1.0, %v341
  %v343 = vrcp.pop %v267
  %v344 = vmul.f32 1.0, %v343
  %v345 = vrcp.pop %v268
  %v346 = vmul.f32 1.0, %v345
  %v347 = vrcp.pop %v269
  %v348 = vmul.f32 1.0, %v347
  %v349 = vrcp.pop %v270
  %v350 = vmul.f32 1.0, %v349
  %v351 = vrcp.pop %v271
  %v352 = vmul.f32 1.0, %v351
  %v353 = vrcp.pop %v272
  %v354 = vmul.f32 1.0, %v353
  %v355 = vrcp.pop %v273
  %v356 = vmul.f32 1.0, %v355
  %v357 = vrcp.pop %v274
  %v358 = vmul.f32 1.0, %v357
  %v359 = vrcp.pop %v275
  %v360 = vmul.f32 1.0, %v359
  %v361 = vrcp.pop %v276
  %v362 = vmul.f32 1.0, %v361
  %v363 = vrcp.pop %v277
  %v364 = vmul.f32 1.0, %v363
  %v365 = vrcp.pop %v278
  %v366 = vmul.f32 1.0, %v365
  %v367 = vrcp.pop %v279
  %v368 = vmul.f32 1.0, %v367
  %v369 = vrcp.pop %v280
  %v370 = vmul.f32 1.0, %v369
  %v371 = vrcp.pop %v281
  %v372 = vmul.f32 1.0, %v371
  %v373 = vrcp.pop %v282
  %v374 = vmul.f32 1.0, %v373
  %v375 = vrcp.pop %v283
  %v376 = vmul.f32 1.0, %v375
  %v377 = vrcp.pop %v284
  %v378 = vmul.f32 1.0, %v377
  %v379 = vrcp.pop %v285
  %v380 = vmul.f32 1.0, %v379
  %v381 = vrcp.pop %v286
  %v382 = vmul.f32 1.0, %v381
  %v383 = vrcp.pop %v287
  %v384 = vmul.f32 1.0, %v383
  %v385 = vrcp.pop %v288
  %v386 = vmul.f32 1.0, %v385
  %v387 = vrcp.pop %v289
  %v388 = vmul.f32 1.0, %v387
  %v389 = vrcp.pop %v290
  %v390 = vmul.f32 1.0, %v389
  %v391 = vrcp.pop %v291
  %v392 = vmul.f32 1.0, %v391
  %v393 = vrcp.pop %v292
  %v394 = vmul.f32 1.0, %v393
  %v395 = vrcp.pop %v293
  %v396 = vmul.f32 1.0, %v395
  %v397 = vrcp.pop %v294
  %v398 = vmul.f32 1.0, %v397
  %v399 = vrcp.pop %v295
  %v400 = vmul.f32 1.0, %v399
  %v401 = vrcp.pop %v296
  %v402 = vmul.f32 1.0, %v401
  %v403 = vrcp.pop %v297
  %v404 = vmul.f32 1.0, %v403
  %v405 = vrcp.pop %v298
  %v406 = vmul.f32 1.0, %v405
  %v407 = vrcp.pop %v299
  %v408 = vmul.f32 1.0, %v407
  %v409 = vrcp.pop %v300
  %v410 = vmul.f32 1.0, %v409
  %v411 = vrcp.pop %v301
  %v412 = vmul.f32 1.0, %v411
  %v413 = vrcp.pop %v302
  %v414 = vmul.f32 1.0, %v413
  %v415 = vrcp.pop %v303
  %v416 = vmul.f32 1.0, %v415
  %v417 = vrcp.pop %v304
  %v418 = vmul.f32 1.0, %v417
  %v419 = vrcp.pop %v305
  %v420 = vmul.f32 1.0, %v419
  %v421 = vrcp.pop %v306
  %v422 = vmul.f32 1.0, %v421
  %v423 = vrcp.pop %v307
  %v424 = vmul.f32 1.0, %v423
  %v425 = vrcp.pop %v308
  %v426 = vmul.f32 1.0, %v425
  %v427 = vrcp.pop %v309
  %v428 = vmul.f32 1.0, %v427
  %v429 = vrcp.pop %v310
  %v430 = vmul.f32 1.0, %v429
  %v431 = vld [vmem:[%s0] sm:$0xff]
  %v432 = vld [vmem:[%s0 + $0x8] sm:$0xff]
  %v433 = vld [vmem:[%s0 + $0x10] sm:$0xff]
  %v434 = vld [vmem:[%s0 + $0x18] sm:$0xff]
  %v435 = vld [vmem:[%s0 + $0x20] sm:$0xff]
  %v436 = vld [vmem:[%s0 + $0x28] sm:$0xff]
  %v437 = vld [vmem:[%s0 + $0x30] sm:$0xff]
  %v438 = vld [vmem:[%s0 + $0x38] sm:$0xff]
  %v439 = vld [vmem:[%s0 + $0x40] sm:$0xff]
  %v440 = vld [vmem:[%s0 + $0x48] sm:$0xff]
  %v441 = vld [vmem:[%s0 + $0x50] sm:$0xff]
  %v442 = vld [vmem:[%s0 + $0x58] sm:$0xff]
  %v443 = vld [vmem:[%s0 + $0x60] sm:$0xff]
  %v444 = vld [vmem:[%s0 + $0x68] sm:$0xff]
  %v445 = vld [vmem:[%s0 + $0x70] sm:$0xff]
  %v446 = vld [vmem:[%s0 + $0x78] sm:$0xff]
  %v447 = vld [vmem:[%s0 + $0x80] sm:$0xff]
  %v448 = vld [vmem:[%s0 + $0x88] sm:$0xff]
  %v449 = vld [vmem:[%s0 + $0x90] sm:$0xff]
  %v450 = vld [vmem:[%s0 + $0x98] sm:$0xff]
  %v451 = vld [vmem:[%s0 + $0xa0] sm:$0xff]
  %v452 = vld [vmem:[%s0 + $0xa8] sm:$0xff]
  %v453 = vld [vmem:[%s0 + $0xb0] sm:$0xff]
  %v454 = vld [vmem:[%s0 + $0xb8] sm:$0xff]
  %v455 = vld [vmem:[%s0 + $0xc0] sm:$0xff]
  %v456 = vld [vmem:[%s0 + $0xc8] sm:$0xff]
  %v457 = vld [vmem:[%s0 + $0xd0] sm:$0xff]
  %v458 = vld [vmem:[%s0 + $0xd8] sm:$0xff]
  %v459 = vld [vmem:[%s0 + $0xe0] sm:$0xff]
  %v460 = vld [vmem:[%s0 + $0xe8] sm:$0xff]
  %v461 = vld [vmem:[%s0 + $0xf0] sm:$0xff]
  %v462 = vld [vmem:[%s0 + $0xf8] sm:$0xff]
  %v463 = vld [vmem:[%s0 + $0x100] sm:$0xff]
  %v464 = vld [vmem:[%s0 + $0x108] sm:$0xff]
  %v465 = vld [vmem:[%s0 + $0x110] sm:$0xff]
  %v466 = vld [vmem:[%s0 + $0x118] sm:$0xff]
  %v467 = vld [vmem:[%s0 + $0x120] sm:$0xff]
  %v468 = vld [vmem:[%s0 + $0x128] sm:$0xff]
  %v469 = vld [vmem:[%s0 + $0x130] sm:$0xff]
  %v470 = vld [vmem:[%s0 + $0x138] sm:$0xff]
  %v471 = vld [vmem:[%s0 + $0x140] sm:$0xff]
  %v472 = vld [vmem:[%s0 + $0x148] sm:$0xff]
  %v473 = vld [vmem:[%s0 + $0x150] sm:$0xff]
  %v474 = vld [vmem:[%s0 + $0x158] sm:$0xff]
  %v475 = vld [vmem:[%s0 + $0x160] sm:$0xff]
  %v476 = vld [vmem:[%s0 + $0x168] sm:$0xff]
  %v477 = vld [vmem:[%s0 + $0x170] sm:$0xff]
  %v478 = vld [vmem:[%s0 + $0x178] sm:$0xff]
  %v479 = vld [vmem:[%s0 + $0x180] sm:$0xff]
  %v480 = vld [vmem:[%s0 + $0x188] sm:$0xff]
  %v481 = vld [vmem:[%s0 + $0x190] sm:$0xff]
  %v482 = vld [vmem:[%s0 + $0x198] sm:$0xff]
  %v483 = vld [vmem:[%s0 + $0x1a0] sm:$0xff]
  %v484 = vld [vmem:[%s0 + $0x1a8] sm:$0xff]
  %v485 = vld [vmem:[%s0 + $0x1b0] sm:$0xff]
  %v486 = vld [vmem:[%s0 + $0x1b8] sm:$0xff]
  %v487 = vld [vmem:[%s0 + $0x1c0] sm:$0xff]
  %v488 = vld [vmem:[%s0 + $0x1c8] sm:$0xff]
  %v489 = vld [vmem:[%s0 + $0x1d0] sm:$0xff]
  %v490 = vld [vmem:[%s0 + $0x1d8] sm:$0xff]
  %v491 = vld [vmem:[%s0 + $0x1e0] sm:$0xff]
  %v492 = vld [vmem:[%s0 + $0x1e8] sm:$0xff]
  %v493 = vld [vmem:[%s0 + $0x1f0] sm:$0xff]
  %v494 = vld [vmem:[%s0 + $0x1f8] sm:$0xff]
  %v495 = vld [vmem:[%s0 + $0x200] sm:$0xff]
  %v496 = vld [vmem:[%s0 + $0x208] sm:$0xff]
  %v497 = vld [vmem:[%s0 + $0x210] sm:$0xff]
  %v498 = vld [vmem:[%s0 + $0x218] sm:$0xff]
  %v499 = vld [vmem:[%s0 + $0x220] sm:$0xff]
  %v500 = vld [vmem:[%s0 + $0x228] sm:$0xff]
  %v501 = vld [vmem:[%s0 + $0x230] sm:$0xff]
  %v502 = vld [vmem:[%s0 + $0x238] sm:$0xff]
  %v503 = vld [vmem:[%s0 + $0x240] sm:$0xff]
  %v504 = vld [vmem:[%s0 + $0x248] sm:$0xff]
  %v505 = vld [vmem:[%s0 + $0x250] sm:$0xff]
  %v506 = vld [vmem:[%s0 + $0x258] sm:$0xff]
  %v507 = vld [vmem:[%s0 + $0x260] sm:$0xff]
  %v508 = vld [vmem:[%s0 + $0x268] sm:$0xff]
  %v509 = vld [vmem:[%s0 + $0x270] sm:$0xff]
  %v510 = vld [vmem:[%s0 + $0x278] sm:$0xff]
  %v511 = vld [vmem:[%s0 + $0x280] sm:$0xff]
  %v512 = vld [vmem:[%s0 + $0x288] sm:$0xff]
  %v513 = vld [vmem:[%s0 + $0x290] sm:$0xff]
  %v514 = vld [vmem:[%s0 + $0x298] sm:$0xff]
  %v515 = vld [vmem:[%s0 + $0x2a0] sm:$0xff]
  %v516 = vld [vmem:[%s0 + $0x2a8] sm:$0xff]
  %v517 = vld [vmem:[%s0 + $0x2b0] sm:$0xff]
  %v518 = vld [vmem:[%s0 + $0x2b8] sm:$0xff]
  %v519 = vld [vmem:[%s0 + $0x2c0] sm:$0xff]
  %v520 = vld [vmem:[%s0 + $0x2c8] sm:$0xff]
  %v521 = vld [vmem:[%s0 + $0x2d0] sm:$0xff]
  %v522 = vld [vmem:[%s0 + $0x2d8] sm:$0xff]
  %v523 = vld [vmem:[%s0 + $0x2e0] sm:$0xff]
  %v524 = vld [vmem:[%s0 + $0x2e8] sm:$0xff]
  %v525 = vld [vmem:[%s0 + $0x2f0] sm:$0xff]
  %v526 = vld [vmem:[%s0 + $0x2f8] sm:$0xff]
  %v527 = vld [vmem:[%s0 + $0x300] sm:$0xff]
  %v528 = vld [vmem:[%s0 + $0x308] sm:$0xff]
  %v529 = vld [vmem:[%s0 + $0x310] sm:$0xff]
  %v530 = vld [vmem:[%s0 + $0x318] sm:$0xff]
  %v531 = vld [vmem:[%s0 + $0x320] sm:$0xff]
  %v532 = vld [vmem:[%s0 + $0x328] sm:$0xff]
  %v533 = vld [vmem:[%s0 + $0x330] sm:$0xff]
  %v534 = vld [vmem:[%s0 + $0x338] sm:$0xff]
  %v535 = vld [vmem:[%s0 + $0x340] sm:$0xff]
  %v536 = vld [vmem:[%s0 + $0x348] sm:$0xff]
  %v537 = vld [vmem:[%s0 + $0x350] sm:$0xff]
  %v538 = vld [vmem:[%s0 + $0x358] sm:$0xff]
  %v539 = vld [vmem:[%s0 + $0x360] sm:$0xff]
  %v540 = vld [vmem:[%s0 + $0x368] sm:$0xff]
  %v541 = vld [vmem:[%s0 + $0x370] sm:$0xff]
  %v542 = vld [vmem:[%s0 + $0x378] sm:$0xff]
  %v543 = vld [vmem:[%s0 + $0x380] sm:$0xff]
  %v544 = vld [vmem:[%s0 + $0x388] sm:$0xff]
  %v545 = vld [vmem:[%s0 + $0x390] sm:$0xff]
  %v546 = vld [vmem:[%s0 + $0x398] sm:$0xff]
  %v547 = vld [vmem:[%s0 + $0x3a0] sm:$0xff]
  %v548 = vld [vmem:[%s0 + $0x3a8] sm:$0xff]
  %v549 = vld [vmem:[%s0 + $0x3b0] sm:$0xff]
  %v550 = vld [vmem:[%s0 + $0x3b8] sm:$0xff]
  %552 = vset.pattern.permute.xlu0 0
  %553 = vperm.xlu0 %552, %v312
  %v554 = vpop.permute.xlu0 %553
  %557 = vset.pattern.permute.xlu0 0
  %558 = vperm.xlu0 %557, %v314
  %v559 = vpop.permute.xlu0 %558
  %562 = vset.pattern.permute.xlu0 0
  %563 = vperm.xlu0 %562, %v316
  %v564 = vpop.permute.xlu0 %563
  %567 = vset.pattern.permute.xlu0 0
  %568 = vperm.xlu0 %567, %v318
  %v569 = vpop.permute.xlu0 %568
  %572 = vset.pattern.permute.xlu0 0
  %573 = vperm.xlu0 %572, %v320
  %v574 = vpop.permute.xlu0 %573
  %577 = vset.pattern.permute.xlu0 0
  %578 = vperm.xlu0 %577, %v322
  %v579 = vpop.permute.xlu0 %578
  %582 = vset.pattern.permute.xlu0 0
  %583 = vperm.xlu0 %582, %v324
  %v584 = vpop.permute.xlu0 %583
  %587 = vset.pattern.permute.xlu0 0
  %588 = vperm.xlu0 %587, %v326
  %v589 = vpop.permute.xlu0 %588
  %592 = vset.pattern.permute.xlu0 0
  %593 = vperm.xlu0 %592, %v328
  %v594 = vpop.permute.xlu0 %593
  %597 = vset.pattern.permute.xlu0 0
  %598 = vperm.xlu0 %597, %v330
  %v599 = vpop.permute.xlu0 %598
  %602 = vset.pattern.permute.xlu0 0
  %603 = vperm.xlu0 %602, %v332
  %v604 = vpop.permute.xlu0 %603
  %607 = vset.pattern.permute.xlu0 0
  %608 = vperm.xlu0 %607, %v334
  %v609 = vpop.permute.xlu0 %608
  %612 = vset.pattern.permute.xlu0 0
  %613 = vperm.xlu0 %612, %v336
  %v614 = vpop.permute.xlu0 %613
  %617 = vset.pattern.permute.xlu0 0
  %618 = vperm.xlu0 %617, %v338
  %v619 = vpop.permute.xlu0 %618
  %622 = vset.pattern.permute.xlu0 0
  %623 = vperm.xlu0 %622, %v340
  %v624 = vpop.permute.xlu0 %623
  %627 = vset.pattern.permute.xlu0 0
  %628 = vperm.xlu0 %627, %v342
  %v629 = vpop.permute.xlu0 %628
  %632 = vset.pattern.permute.xlu0 0
  %633 = vperm.xlu0 %632, %v344
  %v634 = vpop.permute.xlu0 %633
  %637 = vset.pattern.permute.xlu0 0
  %638 = vperm.xlu0 %637, %v346
  %v639 = vpop.permute.xlu0 %638
  %642 = vset.pattern.permute.xlu0 0
  %643 = vperm.xlu0 %642, %v348
  %v644 = vpop.permute.xlu0 %643
  %647 = vset.pattern.permute.xlu0 0
  %648 = vperm.xlu0 %647, %v350
  %v649 = vpop.permute.xlu0 %648
  %652 = vset.pattern.permute.xlu0 0
  %653 = vperm.xlu0 %652, %v352
  %v654 = vpop.permute.xlu0 %653
  %657 = vset.pattern.permute.xlu0 0
  %658 = vperm.xlu0 %657, %v354
  %v659 = vpop.permute.xlu0 %658
  %662 = vset.pattern.permute.xlu0 0
  %663 = vperm.xlu0 %662, %v356
  %v664 = vpop.permute.xlu0 %663
  %667 = vset.pattern.permute.xlu0 0
  %668 = vperm.xlu0 %667, %v358
  %v669 = vpop.permute.xlu0 %668
  %672 = vset.pattern.permute.xlu0 0
  %673 = vperm.xlu0 %672, %v360
  %v674 = vpop.permute.xlu0 %673
  %677 = vset.pattern.permute.xlu0 0
  %678 = vperm.xlu0 %677, %v362
  %v679 = vpop.permute.xlu0 %678
  %682 = vset.pattern.permute.xlu0 0
  %683 = vperm.xlu0 %682, %v364
  %v684 = vpop.permute.xlu0 %683
  %687 = vset.pattern.permute.xlu0 0
  %688 = vperm.xlu0 %687, %v366
  %v689 = vpop.permute.xlu0 %688
  %692 = vset.pattern.permute.xlu0 0
  %693 = vperm.xlu0 %692, %v368
  %v694 = vpop.permute.xlu0 %693
  %697 = vset.pattern.permute.xlu0 0
  %698 = vperm.xlu0 %697, %v370
  %v699 = vpop.permute.xlu0 %698
  %702 = vset.pattern.permute.xlu0 0
  %703 = vperm.xlu0 %702, %v372
  %v704 = vpop.permute.xlu0 %703
  %707 = vset.pattern.permute.xlu0 0
  %708 = vperm.xlu0 %707, %v374
  %v709 = vpop.permute.xlu0 %708
  %712 = vset.pattern.permute.xlu0 0
  %713 = vperm.xlu0 %712, %v376
  %v714 = vpop.permute.xlu0 %713
  %717 = vset.pattern.permute.xlu0 0
  %718 = vperm.xlu0 %717, %v378
  %v719 = vpop.permute.xlu0 %718
  %722 = vset.pattern.permute.xlu0 0
  %723 = vperm.xlu0 %722, %v380
  %v724 = vpop.permute.xlu0 %723
  %727 = vset.pattern.permute.xlu0 0
  %728 = vperm.xlu0 %727, %v382
  %v729 = vpop.permute.xlu0 %728
  %732 = vset.pattern.permute.xlu0 0
  %733 = vperm.xlu0 %732, %v384
  %v734 = vpop.permute.xlu0 %733
  %737 = vset.pattern.permute.xlu0 0
  %738 = vperm.xlu0 %737, %v386
  %v739 = vpop.permute.xlu0 %738
  %742 = vset.pattern.permute.xlu0 0
  %743 = vperm.xlu0 %742, %v388
  %v744 = vpop.permute.xlu0 %743
  %747 = vset.pattern.permute.xlu0 0
  %748 = vperm.xlu0 %747, %v390
  %v749 = vpop.permute.xlu0 %748
  %752 = vset.pattern.permute.xlu0 0
  %753 = vperm.xlu0 %752, %v392
  %v754 = vpop.permute.xlu0 %753
  %757 = vset.pattern.permute.xlu0 0
  %758 = vperm.xlu0 %757, %v394
  %v759 = vpop.permute.xlu0 %758
  %762 = vset.pattern.permute.xlu0 0
  %763 = vperm.xlu0 %762, %v396
  %v764 = vpop.permute.xlu0 %763
  %767 = vset.pattern.permute.xlu0 0
  %768 = vperm.xlu0 %767, %v398
  %v769 = vpop.permute.xlu0 %768
  %772 = vset.pattern.permute.xlu0 0
  %773 = vperm.xlu0 %772, %v400
  %v774 = vpop.permute.xlu0 %773
  %777 = vset.pattern.permute.xlu0 0
  %778 = vperm.xlu0 %777, %v402
  %v779 = vpop.permute.xlu0 %778
  %782 = vset.pattern.permute.xlu0 0
  %783 = vperm.xlu0 %782, %v404
  %v784 = vpop.permute.xlu0 %783
  %787 = vset.pattern.permute.xlu0 0
  %788 = vperm.xlu0 %787, %v406
  %v789 = vpop.permute.xlu0 %788
  %792 = vset.pattern.permute.xlu0 0
  %793 = vperm.xlu0 %792, %v408
  %v794 = vpop.permute.xlu0 %793
  %797 = vset.pattern.permute.xlu0 0
  %798 = vperm.xlu0 %797, %v410
  %v799 = vpop.permute.xlu0 %798
  %802 = vset.pattern.permute.xlu0 0
  %803 = vperm.xlu0 %802, %v412
  %v804 = vpop.permute.xlu0 %803
  %807 = vset.pattern.permute.xlu0 0
  %808 = vperm.xlu0 %807, %v414
  %v809 = vpop.permute.xlu0 %808
  %812 = vset.pattern.permute.xlu0 0
  %813 = vperm.xlu0 %812, %v416
  %v814 = vpop.permute.xlu0 %813
  %817 = vset.pattern.permute.xlu0 0
  %818 = vperm.xlu0 %817, %v418
  %v819 = vpop.permute.xlu0 %818
  %822 = vset.pattern.permute.xlu0 0
  %823 = vperm.xlu0 %822, %v420
  %v824 = vpop.permute.xlu0 %823
  %827 = vset.pattern.permute.xlu0 0
  %828 = vperm.xlu0 %827, %v422
  %v829 = vpop.permute.xlu0 %828
  %832 = vset.pattern.permute.xlu0 0
  %833 = vperm.xlu0 %832, %v424
  %v834 = vpop.permute.xlu0 %833
  %837 = vset.pattern.permute.xlu0 0
  %838 = vperm.xlu0 %837, %v426
  %v839 = vpop.permute.xlu0 %838
  %842 = vset.pattern.permute.xlu0 0
  %843 = vperm.xlu0 %842, %v428
  %v844 = vpop.permute.xlu0 %843
  %847 = vset.pattern.permute.xlu0 0
  %848 = vperm.xlu0 %847, %v430
  %v849 = vpop.permute.xlu0 %848
  %v851 = vmul.f32 %v431, %v554
  %v852 = vmul.f32 %v432, %v554
  %v853 = vmul.f32 %v433, %v559
  %v854 = vmul.f32 %v434, %v559
  %v855 = vmul.f32 %v435, %v564
  %v856 = vmul.f32 %v436, %v564
  %v857 = vmul.f32 %v437, %v569
  %v858 = vmul.f32 %v438, %v569
  %v859 = vmul.f32 %v439, %v574
  %v860 = vmul.f32 %v440, %v574
  %v861 = vmul.f32 %v441, %v579
  %v862 = vmul.f32 %v442, %v579
  %v863 = vmul.f32 %v443, %v584
  %v864 = vmul.f32 %v444, %v584
  %v865 = vmul.f32 %v445, %v589
  %v866 = vmul.f32 %v446, %v589
  %v867 = vmul.f32 %v447, %v594
  %v868 = vmul.f32 %v448, %v594
  %v869 = vmul.f32 %v449, %v599
  %v870 = vmul.f32 %v450, %v599
  %v871 = vmul.f32 %v451, %v604
  %v872 = vmul.f32 %v452, %v604
  %v873 = vmul.f32 %v453, %v609
  %v874 = vmul.f32 %v454, %v609
  %v875 = vmul.f32 %v455, %v614
  %v876 = vmul.f32 %v456, %v614
  %v877 = vmul.f32 %v457, %v619
  %v878 = vmul.f32 %v458, %v619
  %v879 = vmul.f32 %v459, %v624
  %v880 = vmul.f32 %v460, %v624
  %v881 = vmul.f32 %v461, %v629
  %v882 = vmul.f32 %v462, %v629
  %v883 = vmul.f32 %v463, %v634
  %v884 = vmul.f32 %v464, %v634
  %v885 = vmul.f32 %v465, %v639
  %v886 = vmul.f32 %v466, %v639
  %v887 = vmul.f32 %v467, %v644
  %v888 = vmul.f32 %v468, %v644
  %v889 = vmul.f32 %v469, %v649
  %v890 = vmul.f32 %v470, %v649
  %v891 = vmul.f32 %v471, %v654
  %v892 = vmul.f32 %v472, %v654
  %v893 = vmul.f32 %v473, %v659
  %v894 = vmul.f32 %v474, %v659
  %v895 = vmul.f32 %v475, %v664
  %v896 = vmul.f32 %v476, %v664
  %v897 = vmul.f32 %v477, %v669
  %v898 = vmul.f32 %v478, %v669
  %v899 = vmul.f32 %v479, %v674
  %v900 = vmul.f32 %v480, %v674
  %v901 = vmul.f32 %v481, %v679
  %v902 = vmul.f32 %v482, %v679
  %v903 = vmul.f32 %v483, %v684
  %v904 = vmul.f32 %v484, %v684
  %v905 = vmul.f32 %v485, %v689
  %v906 = vmul.f32 %v486, %v689
  %v907 = vmul.f32 %v487, %v694
  %v908 = vmul.f32 %v488, %v694
  %v909 = vmul.f32 %v489, %v699
  %v910 = vmul.f32 %v490, %v699
  %v911 = vmul.f32 %v491, %v704
  %v912 = vmul.f32 %v492, %v704
  %v913 = vmul.f32 %v493, %v709
  %v914 = vmul.f32 %v494, %v709
  %v915 = vmul.f32 %v495, %v714
  %v916 = vmul.f32 %v496, %v714
  %v917 = vmul.f32 %v497, %v719
  %v918 = vmul.f32 %v498, %v719
  %v919 = vmul.f32 %v499, %v724
  %v920 = vmul.f32 %v500, %v724
  %v921 = vmul.f32 %v501, %v729
  %v922 = vmul.f32 %v502, %v729
  %v923 = vmul.f32 %v503, %v734
  %v924 = vmul.f32 %v504, %v734
  %v925 = vmul.f32 %v505, %v739
  %v926 = vmul.f32 %v506, %v739
  %v927 = vmul.f32 %v507, %v744
  %v928 = vmul.f32 %v508, %v744
  %v929 = vmul.f32 %v509, %v749
  %v930 = vmul.f32 %v510, %v749
  %v931 = vmul.f32 %v511, %v754
  %v932 = vmul.f32 %v512, %v754
  %v933 = vmul.f32 %v513, %v759
  %v934 = vmul.f32 %v514, %v759
  %v935 = vmul.f32 %v515, %v764
  %v936 = vmul.f32 %v516, %v764
  %v937 = vmul.f32 %v517, %v769
  %v938 = vmul.f32 %v518, %v769
  %v939 = vmul.f32 %v519, %v774
  %v940 = vmul.f32 %v520, %v774
  %v941 = vmul.f32 %v521, %v779
  %v942 = vmul.f32 %v522, %v779
  %v943 = vmul.f32 %v523, %v784
  %v944 = vmul.f32 %v524, %v784
  %v945 = vmul.f32 %v525, %v789
  %v946 = vmul.f32 %v526, %v789
  %v947 = vmul.f32 %v527, %v794
  %v948 = vmul.f32 %v528, %v794
  %v949 = vmul.f32 %v529, %v799
  %v950 = vmul.f32 %v530, %v799
  %v951 = vmul.f32 %v531, %v804
  %v952 = vmul.f32 %v532, %v804
  %v953 = vmul.f32 %v533, %v809
  %v954 = vmul.f32 %v534, %v809
  %v955 = vmul.f32 %v535, %v814
  %v956 = vmul.f32 %v536, %v814
  %v957 = vmul.f32 %v537, %v819
  %v958 = vmul.f32 %v538, %v819
  %v959 = vmul.f32 %v539, %v824
  %v960 = vmul.f32 %v540, %v824
  %v961 = vmul.f32 %v541, %v829
  %v962 = vmul.f32 %v542, %v829
  %v963 = vmul.f32 %v543, %v834
  %v964 = vmul.f32 %v544, %v834
  %v965 = vmul.f32 %v545, %v839
  %v966 = vmul.f32 %v546, %v839
  %v967 = vmul.f32 %v547, %v844
  %v968 = vmul.f32 %v548, %v844
  %v969 = vmul.f32 %v549, %v849
  %v970 = vmul.f32 %v550, %v849
  %971 = vst [vmem:[%s2] sm:$0xff] %v851
  %vm972 = vcmask 556032
  %973 = vst.msk [vmem:[%s2 + $0x8] sm:$0xff] %vm972, %v852
  %974 = vst [vmem:[%s2 + $0x10] sm:$0xff] %v853
  %975 = vst.msk [vmem:[%s2 + $0x18] sm:$0xff] %vm972, %v854
  %976 = vst [vmem:[%s2 + $0x20] sm:$0xff] %v855
  %977 = vst.msk [vmem:[%s2 + $0x28] sm:$0xff] %vm972, %v856
  %978 = vst [vmem:[%s2 + $0x30] sm:$0xff] %v857
  %979 = vst.msk [vmem:[%s2 + $0x38] sm:$0xff] %vm972, %v858
  %980 = vst [vmem:[%s2 + $0x40] sm:$0xff] %v859
  %981 = vst.msk [vmem:[%s2 + $0x48] sm:$0xff] %vm972, %v860
  %982 = vst [vmem:[%s2 + $0x50] sm:$0xff] %v861
  %983 = vst.msk [vmem:[%s2 + $0x58] sm:$0xff] %vm972, %v862
  %984 = vst [vmem:[%s2 + $0x60] sm:$0xff] %v863
  %985 = vst.msk [vmem:[%s2 + $0x68] sm:$0xff] %vm972, %v864
  %986 = vst [vmem:[%s2 + $0x70] sm:$0xff] %v865
  %987 = vst.msk [vmem:[%s2 + $0x78] sm:$0xff] %vm972, %v866
  %988 = vst [vmem:[%s2 + $0x80] sm:$0xff] %v867
  %989 = vst.msk [vmem:[%s2 + $0x88] sm:$0xff] %vm972, %v868
  %990 = vst [vmem:[%s2 + $0x90] sm:$0xff] %v869
  %991 = vst.msk [vmem:[%s2 + $0x98] sm:$0xff] %vm972, %v870
  %992 = vst [vmem:[%s2 + $0xa0] sm:$0xff] %v871
  %993 = vst.msk [vmem:[%s2 + $0xa8] sm:$0xff] %vm972, %v872
  %994 = vst [vmem:[%s2 + $0xb0] sm:$0xff] %v873
  %995 = vst.msk [vmem:[%s2 + $0xb8] sm:$0xff] %vm972, %v874
  %996 = vst [vmem:[%s2 + $0xc0] sm:$0xff] %v875
  %997 = vst.msk [vmem:[%s2 + $0xc8] sm:$0xff] %vm972, %v876
  %998 = vst [vmem:[%s2 + $0xd0] sm:$0xff] %v877
  %999 = vst.msk [vmem:[%s2 + $0xd8] sm:$0xff] %vm972, %v878
  %1000 = vst [vmem:[%s2 + $0xe0] sm:$0xff] %v879
  %1001 = vst.msk [vmem:[%s2 + $0xe8] sm:$0xff] %vm972, %v880
  %1002 = vst [vmem:[%s2 + $0xf0] sm:$0xff] %v881
  %1003 = vst.msk [vmem:[%s2 + $0xf8] sm:$0xff] %vm972, %v882
  %1004 = vst [vmem:[%s2 + $0x100] sm:$0xff] %v883
  %1005 = vst.msk [vmem:[%s2 + $0x108] sm:$0xff] %vm972, %v884
  %1006 = vst [vmem:[%s2 + $0x110] sm:$0xff] %v885
  %1007 = vst.msk [vmem:[%s2 + $0x118] sm:$0xff] %vm972, %v886
  %1008 = vst [vmem:[%s2 + $0x120] sm:$0xff] %v887
  %1009 = vst.msk [vmem:[%s2 + $0x128] sm:$0xff] %vm972, %v888
  %1010 = vst [vmem:[%s2 + $0x130] sm:$0xff] %v889
  %1011 = vst.msk [vmem:[%s2 + $0x138] sm:$0xff] %vm972, %v890
  %1012 = vst [vmem:[%s2 + $0x140] sm:$0xff] %v891
  %1013 = vst.msk [vmem:[%s2 + $0x148] sm:$0xff] %vm972, %v892
  %1014 = vst [vmem:[%s2 + $0x150] sm:$0xff] %v893
  %1015 = vst.msk [vmem:[%s2 + $0x158] sm:$0xff] %vm972, %v894
  %1016 = vst [vmem:[%s2 + $0x160] sm:$0xff] %v895
  %1017 = vst.msk [vmem:[%s2 + $0x168] sm:$0xff] %vm972, %v896
  %1018 = vst [vmem:[%s2 + $0x170] sm:$0xff] %v897
  %1019 = vst.msk [vmem:[%s2 + $0x178] sm:$0xff] %vm972, %v898
  %1020 = vst [vmem:[%s2 + $0x180] sm:$0xff] %v899
  %1021 = vst.msk [vmem:[%s2 + $0x188] sm:$0xff] %vm972, %v900
  %1022 = vst [vmem:[%s2 + $0x190] sm:$0xff] %v901
  %1023 = vst.msk [vmem:[%s2 + $0x198] sm:$0xff] %vm972, %v902
  %1024 = vst [vmem:[%s2 + $0x1a0] sm:$0xff] %v903
  %1025 = vst.msk [vmem:[%s2 + $0x1a8] sm:$0xff] %vm972, %v904
  %1026 = vst [vmem:[%s2 + $0x1b0] sm:$0xff] %v905
  %1027 = vst.msk [vmem:[%s2 + $0x1b8] sm:$0xff] %vm972, %v906
  %1028 = vst [vmem:[%s2 + $0x1c0] sm:$0xff] %v907
  %1029 = vst.msk [vmem:[%s2 + $0x1c8] sm:$0xff] %vm972, %v908
  %1030 = vst [vmem:[%s2 + $0x1d0] sm:$0xff] %v909
  %1031 = vst.msk [vmem:[%s2 + $0x1d8] sm:$0xff] %vm972, %v910
  %1032 = vst [vmem:[%s2 + $0x1e0] sm:$0xff] %v911
  %1033 = vst.msk [vmem:[%s2 + $0x1e8] sm:$0xff] %vm972, %v912
  %1034 = vst [vmem:[%s2 + $0x1f0] sm:$0xff] %v913
  %1035 = vst.msk [vmem:[%s2 + $0x1f8] sm:$0xff] %vm972, %v914
  %1036 = vst [vmem:[%s2 + $0x200] sm:$0xff] %v915
  %1037 = vst.msk [vmem:[%s2 + $0x208] sm:$0xff] %vm972, %v916
  %1038 = vst [vmem:[%s2 + $0x210] sm:$0xff] %v917
  %1039 = vst.msk [vmem:[%s2 + $0x218] sm:$0xff] %vm972, %v918
  %1040 = vst [vmem:[%s2 + $0x220] sm:$0xff] %v919
  %1041 = vst.msk [vmem:[%s2 + $0x228] sm:$0xff] %vm972, %v920
  %1042 = vst [vmem:[%s2 + $0x230] sm:$0xff] %v921
  %1043 = vst.msk [vmem:[%s2 + $0x238] sm:$0xff] %vm972, %v922
  %1044 = vst [vmem:[%s2 + $0x240] sm:$0xff] %v923
  %1045 = vst.msk [vmem:[%s2 + $0x248] sm:$0xff] %vm972, %v924
  %1046 = vst [vmem:[%s2 + $0x250] sm:$0xff] %v925
  %1047 = vst.msk [vmem:[%s2 + $0x258] sm:$0xff] %vm972, %v926
  %1048 = vst [vmem:[%s2 + $0x260] sm:$0xff] %v927
  %1049 = vst.msk [vmem:[%s2 + $0x268] sm:$0xff] %vm972, %v928
  %1050 = vst [vmem:[%s2 + $0x270] sm:$0xff] %v929
  %1051 = vst.msk [vmem:[%s2 + $0x278] sm:$0xff] %vm972, %v930
  %1052 = vst [vmem:[%s2 + $0x280] sm:$0xff] %v931
  %1053 = vst.msk [vmem:[%s2 + $0x288] sm:$0xff] %vm972, %v932
  %1054 = vst [vmem:[%s2 + $0x290] sm:$0xff] %v933
  %1055 = vst.msk [vmem:[%s2 + $0x298] sm:$0xff] %vm972, %v934
  %1056 = vst [vmem:[%s2 + $0x2a0] sm:$0xff] %v935
  %1057 = vst.msk [vmem:[%s2 + $0x2a8] sm:$0xff] %vm972, %v936
  %1058 = vst [vmem:[%s2 + $0x2b0] sm:$0xff] %v937
  %1059 = vst.msk [vmem:[%s2 + $0x2b8] sm:$0xff] %vm972, %v938
  %1060 = vst [vmem:[%s2 + $0x2c0] sm:$0xff] %v939
  %1061 = vst.msk [vmem:[%s2 + $0x2c8] sm:$0xff] %vm972, %v940
  %1062 = vst [vmem:[%s2 + $0x2d0] sm:$0xff] %v941
  %1063 = vst.msk [vmem:[%s2 + $0x2d8] sm:$0xff] %vm972, %v942
  %1064 = vst [vmem:[%s2 + $0x2e0] sm:$0xff] %v943
  %1065 = vst.msk [vmem:[%s2 + $0x2e8] sm:$0xff] %vm972, %v944
  %1066 = vst [vmem:[%s2 + $0x2f0] sm:$0xff] %v945
  %1067 = vst.msk [vmem:[%s2 + $0x2f8] sm:$0xff] %vm972, %v946
  %1068 = vst [vmem:[%s2 + $0x300] sm:$0xff] %v947
  %1069 = vst.msk [vmem:[%s2 + $0x308] sm:$0xff] %vm972, %v948
  %1070 = vst [vmem:[%s2 + $0x310] sm:$0xff] %v949
  %1071 = vst.msk [vmem:[%s2 + $0x318] sm:$0xff] %vm972, %v950
  %1072 = vst [vmem:[%s2 + $0x320] sm:$0xff] %v951
  %1073 = vst.msk [vmem:[%s2 + $0x328] sm:$0xff] %vm972, %v952
  %1074 = vst [vmem:[%s2 + $0x330] sm:$0xff] %v953
  %1075 = vst.msk [vmem:[%s2 + $0x338] sm:$0xff] %vm972, %v954
  %1076 = vst [vmem:[%s2 + $0x340] sm:$0xff] %v955
  %1077 = vst.msk [vmem:[%s2 + $0x348] sm:$0xff] %vm972, %v956
  %1078 = vst [vmem:[%s2 + $0x350] sm:$0xff] %v957
  %1079 = vst.msk [vmem:[%s2 + $0x358] sm:$0xff] %vm972, %v958
  %1080 = vst [vmem:[%s2 + $0x360] sm:$0xff] %v959
  %1081 = vst.msk [vmem:[%s2 + $0x368] sm:$0xff] %vm972, %v960
  %1082 = vst [vmem:[%s2 + $0x370] sm:$0xff] %v961
  %1083 = vst.msk [vmem:[%s2 + $0x378] sm:$0xff] %vm972, %v962
  %1084 = vst [vmem:[%s2 + $0x380] sm:$0xff] %v963
  %1085 = vst.msk [vmem:[%s2 + $0x388] sm:$0xff] %vm972, %v964
  %1086 = vst [vmem:[%s2 + $0x390] sm:$0xff] %v965
  %1087 = vst.msk [vmem:[%s2 + $0x398] sm:$0xff] %vm972, %v966
  %1088 = vst [vmem:[%s2 + $0x3a0] sm:$0xff] %v967
  %1089 = vst.msk [vmem:[%s2 + $0x3a8] sm:$0xff] %vm972, %v968
  %1090 = vst [vmem:[%s2 + $0x3b0] sm:$0xff] %v969
  %1091 = vst.msk [vmem:[%s2 + $0x3b8] sm:$0xff] %vm972, %v970
  // Predicated region
  $region10: #{tpu_custom_call.1} parent=0 // pred_check
    _
  $region11: #{tpu_custom_call.1} parent=0 // pred_check_branch
    %1093 = sbr.rel (0) target = $region13
  $region12: #{tpu_custom_call.1} parent=0 // pred_region
    _
  $region13: #{tpu_custom_call.1} parent=0 // pred_fallthru
    _
  // Predicated region
  $region14: #{tpu_custom_call.1} parent=0 // pred_check
    _
  $region15: #{tpu_custom_call.1} parent=0 // pred_check_branch
    %1095 = sbr.rel (0) target = $region17
  $region16: #{tpu_custom_call.1} parent=0 // pred_region
    _
  $region17: #{tpu_custom_call.1} parent=0 // pred_fallthru
    _

</llo_original>
